<compile_context>
chip_gen: v7x
topology: tpu7x:2x2x1
jax: 0.10.0
libtpu: 0.0.40
codegen_flags: <defaults>
</compile_context>

<pallas_src>
import functools
import math

import jax
import jax.numpy as jnp
from jax import lax
from jax.experimental import pallas as pl
from jax.experimental.pallas import tpu as pltpu


def _bn1d_kernel(*refs, eps, gamma, beta, unbiased):
    """Training-mode BatchNorm1d on one (N, TILE_F) feature-column block."""
    it = iter(refs)
    x_ref = next(it)
    w_ref = next(it) if gamma else None
    b_ref = next(it) if beta else None
    y_ref = next(it)
    mean_ref = next(it)
    std_ref = next(it)

    x = x_ref[...].astype(jnp.float32)
    n = x.shape[0]

    # mean over the batch dimension (dim 0) -> (1, TILE_F)
    mean = jnp.mean(x, axis=0, keepdims=True)
    diff = x - mean

    # torch.std(dim=0, unbiased=...): divisor is (n-1) if unbiased else n
    # (unbiased=True with n==1 gives inf/nan, same as the torch reference).
    denom = float(n - 1) if unbiased else float(n)
    var = jnp.sum(diff * diff, axis=0, keepdims=True) / jnp.float32(denom)
    # `diff` dies here; the apply below uses x*scale + offset.

    # .clamp(eps) on std == sqrt(clamp(var, eps^2)); do it on var so a single
    # per-feature rsqrt (EUP) replaces a full-tile divide.
    var_c = jnp.maximum(var, jnp.float32(eps * eps))
    inv_std = lax.rsqrt(var_c)          # (1, TILE_F) — one EUP pass
    std = var_c * inv_std               # == sqrt(var_c); VPU mul, no 2nd EUP op

    scale = inv_std
    if gamma:
        scale = scale * w_ref[...].astype(jnp.float32)
    offset = -mean * scale              # fold mean (and beta) into the offset
    if beta:
        offset = offset + b_ref[...].astype(jnp.float32)

    # per-element work: one multiply + one add on the VPU
    y_ref[...] = (x * scale + offset).astype(y_ref.dtype)
    mean_ref[...] = mean.astype(mean_ref.dtype)
    std_ref[...] = std.astype(std_ref.dtype)


def _vmem_config():
    """Generation-aware (vmem_limit_bytes, tile-sizing budget)."""
    cap = None
    try:
        info = pltpu.get_tpu_info()
        cap = int(getattr(info, "vmem_capacity_bytes"))
    except Exception:
        cap = None
    if cap is None:
        cap = 64 * 1024 * 1024                    # conservative (v7x-sized)
    if cap <= 64 * 1024 * 1024:
        # v7x: 64 MiB physical -> keep the scoped limit well below it.
        vmem_limit = 48 * 1024 * 1024
    else:
        # v5e / v6e: 128 MiB physical -> allow much larger tiles.
        vmem_limit = 96 * 1024 * 1024
    budget = int(vmem_limit * 0.6)
    return vmem_limit, budget


def _choose_tile_f(N, F, itemsize, budget):
    """Largest lane-aligned feature tile that fits the VMEM budget,
    capped so the grid has at least two steps whenever F allows it."""
    if F <= 128:
        return F                                  # full-dim block (tiling rule)
    # Per-feature-column VMEM cost: double-buffered x-in + y-out (2 bufs each)
    # plus ~2 f32 (N,·) temporaries in the compute, plus small per-feature rows.
    per_f = 4 * N * itemsize + 2 * N * 4 + 16 * 4
    max_by_budget = max(128, (budget // per_f) // 128 * 128)
    max_lane_tile = (F // 128) * 128              # largest 128-multiple <= F
    half_cap = max(128, ((F // 2) // 128) * 128)  # guarantee >= 2 grid steps
    # TODO(synk): if N is so large that even a (N, 128) column busts the budget,
    # switch to a 2D grid (feature 'parallel', batch 'arbitrary' last) that
    # accumulates per-feature sum / sum-of-squares into (1, TILE_F) scratch and
    # applies in a second pass.
    return min(max_by_budget, max_lane_tile, half_cap)


def batch_norm_1d(x, weight=None, bias=None, *, eps=1e-5, gamma=False,
                  beta=False, unbiased=False):
    """Returns (y, batch_mean, batch_std) — training-mode forward.

    Tiles the feature axis into lane-dense blocks; each block computes its own
    batch statistics (the reduction is over dim 0 only, so F-tiles are
    independent and the grid axis is fully parallel)."""
    N, F = x.shape
    itemsize = jnp.dtype(x.dtype).itemsize

    vmem_limit, budget = _vmem_config()
    TILE_F = _choose_tile_f(N, F, itemsize, budget)
    grid = (pl.cdiv(F, TILE_F),)

    # Deeper buffering only pays off in the tiny-block, multi-step regime.
    small_block = (N * TILE_F * itemsize < (1 << 20)) and grid[0] > 2
    if small_block:
        x_spec = pl.BlockSpec((N, TILE_F), lambda j: (0, j),
                              pipeline_mode=pl.Buffered(3))
    else:
        x_spec = pl.BlockSpec((N, TILE_F), lambda j: (0, j))
    # TODO(synk): sweep pl.Buffered(3) on the y out_spec as well for the
    # tiny-block regime; kept default-buffered here.
    y_spec = pl.BlockSpec((N, TILE_F), lambda j: (0, j))
    row_spec = pl.BlockSpec((1, TILE_F), lambda j: (0, j))

    in_specs = [x_spec]
    args = [x]
    if gamma:
        in_specs.append(row_spec)
        args.append(weight)
    if beta:
        in_specs.append(row_spec)
        args.append(bias)

    kernel = functools.partial(
        _bn1d_kernel, eps=eps, gamma=gamma, beta=beta, unbiased=unbiased)

    bytes_accessed = int(2 * N * F * itemsize
                         + (2 + int(gamma) + int(beta)) * F * 4)
    cost = pl.CostEstimate(
        flops=int(6 * N * F),
        transcendentals=int(F),          # one rsqrt per feature
        bytes_accessed=bytes_accessed,
    )

    y, mean, std = pl.pallas_call(
        kernel,
        out_shape=(
            jax.ShapeDtypeStruct((N, F), x.dtype),
            jax.ShapeDtypeStruct((1, F), jnp.float32),
            jax.ShapeDtypeStruct((1, F), jnp.float32),
        ),
        grid=grid,
        in_specs=in_specs,
        out_specs=(y_spec, row_spec, row_spec),
        compiler_params=pltpu.CompilerParams(
            dimension_semantics=("parallel",),   # megacore shard on v7x
            vmem_limit_bytes=vmem_limit,
        ),
        cost_estimate=cost,
    )(*args)
    return y, mean, std


def update_running_stats(running_mean, running_std, mean, std, *,
                         momentum, unbiased, n):
    """Plain-JAX glue replicating the reference buffer updates verbatim
    (including the original operator-precedence behavior when unbiased=False)."""
    new_rm = running_mean + momentum * (mean - running_mean)
    if unbiased:
        new_rs = running_std + momentum * std
    else:
        new_rs = running_std + momentum * (math.sqrt(n / (n - 1)) - running_std)
    return new_rm, new_rs


if __name__ == "__main__":
    key = jax.random.PRNGKey(0)
    eps, momentum, unbiased = 1e-5, 0.1, False

    def ref_forward(xv, w=None, b=None):
        m = jnp.mean(xv, axis=0, keepdims=True)
        s = jnp.maximum(
            jnp.sqrt(jnp.mean((xv - m) ** 2, axis=0, keepdims=True)), eps)
        out = (xv - m) / s
        if w is not None:
            out = out * w
        if b is not None:
            out = out + b
        return out, m, s

    # ---- primary small-shape test: (batch, num_features) = (8, 32) ----------
    N, F = 8, 32
    x = jax.random.normal(key, (N, F), dtype=jnp.float32)
    weight = jnp.ones((1, F), dtype=jnp.float32)       # nn.Parameter(ones)
    bias = jnp.zeros((1, F), dtype=jnp.float32)        # nn.Parameter(zeros)
    running_mean = jnp.zeros((1, F), dtype=jnp.float32)
    running_std = jnp.ones((1, F), dtype=jnp.float32)

    y, mean, std = batch_norm_1d(
        x, weight, bias, eps=eps, gamma=True, beta=True, unbiased=unbiased)
    running_mean, running_std = update_running_stats(
        running_mean, running_std, mean, std,
        momentum=momentum, unbiased=unbiased, n=N)
    jax.block_until_ready((y, mean, std, running_mean, running_std))

    ref_y, ref_m, ref_s = ref_forward(x, weight, bias)
    assert jnp.allclose(y, ref_y, atol=1e-5, rtol=1e-5)
    assert jnp.allclose(mean, ref_m, atol=1e-6, rtol=1e-6)
    assert jnp.allclose(std, ref_s, atol=1e-6, rtol=1e-6)

    # ---- no-gamma/no-beta path (weight/bias not passed at all) ---------------
    y_p, m_p, s_p = batch_norm_1d(x, eps=eps, unbiased=unbiased)
    jax.block_until_ready((y_p, m_p, s_p))
    ref_yp, _, _ = ref_forward(x)
    assert jnp.allclose(y_p, ref_yp, atol=1e-5, rtol=1e-5)

    # ---- larger feature dim: exercises lane tiling, >=2 grid steps, a partial
    #      last block, and the deeper-buffered tiny-block path. ---------------
    N2, F2 = 16, 640
    x2 = jax.random.normal(jax.random.PRNGKey(1), (N2, F2), dtype=jnp.float32)
    y2, m2, s2 = batch_norm_1d(x2, eps=eps, unbiased=unbiased)
    jax.block_until_ready((y2, m2, s2))
    ref_y2, ref_m2, ref_s2 = ref_forward(x2)
    assert jnp.allclose(y2, ref_y2, atol=1e-5, rtol=1e-5)
    assert jnp.allclose(m2, ref_m2, atol=1e-5, rtol=1e-5)
    assert jnp.allclose(s2, ref_s2, atol=1e-5, rtol=1e-5)

    print("KERNEL_OK")
</pallas_src>

<mosaic_0001>
module attributes {stable_mosaic.version = 11 : i64} {
  func.func @_bn1d_kernel(%arg0: i32, %arg1: memref<8x32xf32, #tpu.memory_space<vmem>>, %arg2: memref<1x32xf32, #tpu.memory_space<vmem>>, %arg3: memref<1x32xf32, #tpu.memory_space<vmem>>, %arg4: memref<8x32xf32, #tpu.memory_space<vmem>>, %arg5: memref<1x32xf32, #tpu.memory_space<vmem>>, %arg6: memref<1x32xf32, #tpu.memory_space<vmem>>) attributes {dimension_semantics = [#tpu.dimension_semantics<parallel>], iteration_bounds = array<i64: 1>, scalar_prefetch = 0 : i64, scratch_operands = 0 : i64, tpu.core_type = #tpu.core_type<tc>, window_params = [{transform_indices = @transform_0, window_bounds = array<i64: 8, 32>}, {transform_indices = @transform_1, window_bounds = array<i64: 1, 32>}, {transform_indices = @transform_2, window_bounds = array<i64: 1, 32>}, {transform_indices = @transform_3, window_bounds = array<i64: 8, 32>}, {transform_indices = @transform_4, window_bounds = array<i64: 1, 32>}, {transform_indices = @transform_5, window_bounds = array<i64: 1, 32>}]} {
    %c0 = arith.constant 0 : index
    %c0_0 = arith.constant 0 : index
    %0 = vector.load %arg1[%c0, %c0_0] : memref<8x32xf32, #tpu.memory_space<vmem>>, vector<8x32xf32>
    %cst = arith.constant dense<0.000000e+00> : vector<32xf32>
    %1 = vector.multi_reduction <add>, %0, %cst [0] : vector<8x32xf32> to vector<32xf32>
    %2 = vector.shape_cast %1 : vector<32xf32> to vector<1x32xf32>
    %cst_1 = arith.constant 8.000000e+00 : f32
    %3 = vector.broadcast %cst_1 : f32 to vector<1x32xf32>
    %4 = arith.divf %2, %3 : vector<1x32xf32>
    %5 = vector.broadcast %4 : vector<1x32xf32> to vector<8x32xf32>
    %6 = arith.subf %0, %5 : vector<8x32xf32>
    %7 = arith.mulf %6, %6 : vector<8x32xf32>
    %cst_2 = arith.constant dense<0.000000e+00> : vector<32xf32>
    %8 = vector.multi_reduction <add>, %7, %cst_2 [0] : vector<8x32xf32> to vector<32xf32>
    %9 = vector.shape_cast %8 : vector<32xf32> to vector<1x32xf32>
    %cst_3 = arith.constant 8.000000e+00 : f32
    %10 = vector.broadcast %cst_3 : f32 to vector<1x32xf32>
    %11 = arith.divf %9, %10 : vector<1x32xf32>
    %cst_4 = arith.constant 1.000000e-10 : f32
    %12 = vector.broadcast %cst_4 : f32 to vector<1x32xf32>
    %13 = arith.maximumf %11, %12 : vector<1x32xf32>
    %14 = math.rsqrt %13 : vector<1x32xf32>
    %15 = arith.mulf %13, %14 : vector<1x32xf32>
    %c0_5 = arith.constant 0 : index
    %c0_6 = arith.constant 0 : index
    %16 = vector.load %arg2[%c0_5, %c0_6] : memref<1x32xf32, #tpu.memory_space<vmem>>, vector<1x32xf32>
    %17 = arith.mulf %14, %16 : vector<1x32xf32>
    %cst_7 = arith.constant 0.000000e+00 : f32
    %18 = vector.broadcast %cst_7 : f32 to vector<1x32xf32>
    %19 = arith.subf %18, %4 : vector<1x32xf32>
    %20 = arith.mulf %19, %17 : vector<1x32xf32>
    %c0_8 = arith.constant 0 : index
    %c0_9 = arith.constant 0 : index
    %21 = vector.load %arg3[%c0_8, %c0_9] : memref<1x32xf32, #tpu.memory_space<vmem>>, vector<1x32xf32>
    %22 = arith.addf %20, %21 : vector<1x32xf32>
    %23 = vector.broadcast %17 : vector<1x32xf32> to vector<8x32xf32>
    %24 = arith.mulf %0, %23 : vector<8x32xf32>
    %25 = vector.broadcast %22 : vector<1x32xf32> to vector<8x32xf32>
    %26 = arith.addf %24, %25 : vector<8x32xf32>
    %c0_10 = arith.constant 0 : index
    %c0_11 = arith.constant 0 : index
    %27 = vector.load %arg4[%c0_10, %c0_11] : memref<8x32xf32, #tpu.memory_space<vmem>>, vector<8x32xf32>
    tpu.vector_store %arg4[%c0_10, %c0_11], %26 {strides = array<i32>} : memref<8x32xf32, #tpu.memory_space<vmem>>, vector<8x32xf32>,
    %c0_12 = arith.constant 0 : index
    %c0_13 = arith.constant 0 : index
    %28 = vector.load %arg5[%c0_12, %c0_13] : memref<1x32xf32, #tpu.memory_space<vmem>>, vector<1x32xf32>
    tpu.vector_store %arg5[%c0_12, %c0_13], %4 {strides = array<i32>} : memref<1x32xf32, #tpu.memory_space<vmem>>, vector<1x32xf32>,
    %c0_14 = arith.constant 0 : index
    %c0_15 = arith.constant 0 : index
    %29 = vector.load %arg6[%c0_14, %c0_15] : memref<1x32xf32, #tpu.memory_space<vmem>>, vector<1x32xf32>
    tpu.vector_store %arg6[%c0_14, %c0_15], %15 {strides = array<i32>} : memref<1x32xf32, #tpu.memory_space<vmem>>, vector<1x32xf32>,
    return
  }
  func.func @transform_0(%arg0: i32) -> (i32, i32) {
    %c0_i32 = arith.constant 0 : i32
    %c0_i32_0 = arith.constant 0 : i32
    return %c0_i32, %arg0 : i32, i32
  }
  func.func @transform_1(%arg0: i32) -> (i32, i32) {
    %c0_i32 = arith.constant 0 : i32
    %c0_i32_0 = arith.constant 0 : i32
    return %c0_i32, %arg0 : i32, i32
  }
  func.func @transform_2(%arg0: i32) -> (i32, i32) {
    %c0_i32 = arith.constant 0 : i32
    %c0_i32_0 = arith.constant 0 : i32
    return %c0_i32, %arg0 : i32, i32
  }
  func.func @transform_3(%arg0: i32) -> (i32, i32) {
    %c0_i32 = arith.constant 0 : i32
    %c0_i32_0 = arith.constant 0 : i32
    return %c0_i32, %arg0 : i32, i32
  }
  func.func @transform_4(%arg0: i32) -> (i32, i32) {
    %c0_i32 = arith.constant 0 : i32
    %c0_i32_0 = arith.constant 0 : i32
    return %c0_i32, %arg0 : i32, i32
  }
  func.func @transform_5(%arg0: i32) -> (i32, i32) {
    %c0_i32 = arith.constant 0 : i32
    %c0_i32_0 = arith.constant 0 : i32
    return %c0_i32, %arg0 : i32, i32
  }
}

</mosaic_0001>

<llo_original>
// kernel: tpu_custom_call.1
$region0: #{tpu_custom_call.1}
  #allocation0 [shape = 'u32[]', space=smem, size = 0x4, offset = 0x4, fixed_abs, tag = 'smem constant byte address 0x4 - core index']
  #allocation1 [shape = 'u32[144,128]{1,0:T(1,128)}', space=vmem, size = 0x12000, scoped, tag = 'internal scratch']
  %s0 = inlined_call_operand.hbm [shape: f32[8,32], index: 0, kind: input, shape index: {}]
  %s1 = inlined_call_operand.vmem [shape: f32[1,32], index: 1, kind: input, shape index: {}]
  %s2 = inlined_call_operand.vmem [shape: f32[1,32], index: 2, kind: input, shape index: {}]
  %s3 = inlined_call_operand.hbm [shape: f32[8,32], index: 3, kind: output, shape index: {0}]
  %s4 = inlined_call_operand.hbm [shape: f32[1,32], index: 4, kind: output, shape index: {1}]
  %s5 = inlined_call_operand.hbm [shape: f32[1,32], index: 5, kind: output, shape index: {2}]
  %6 = xla_tuple %s3, %s4, %s5
  %s7 = sld [smem:[#allocation0]]
  $region42: #{tpu_custom_call.1} parent=0
    _
  %s9 = ssub.s32 1, %s7
  %s10 = scalar_select 0, %s9, %s7
  $region1: #{tpu_custom_call.1} parent=0
    #allocation2 [shape = 'u8[4096]{0}', space=vmem, size = 0x1000, scoped, tag = 'input window, operand 0, single buffered']
    #allocation3 [shape = 's32[1]{0}', space=sflag, size = 0x4, scoped, tag = 'scoped memory for tpu_custom_call.1']
    #allocation4 [shape = 's32[1]{0}', space=sflag, size = 0x4, scoped, tag = 'scoped memory for tpu_custom_call.1']
    #allocation5 [shape = 'u8[4096]{0}', space=vmem, size = 0x1000, scoped, tag = 'output window, operand 0, single buffered']
    #allocation6 [shape = 'u8[512]{0}', space=vmem, size = 0x400, scoped, tag = 'output window, operand 1, single buffered']
    #allocation7 [shape = 's32[1]{0}', space=sflag, size = 0x4, scoped, tag = 'scoped memory for tpu_custom_call.1']
    #allocation8 [shape = 'u8[512]{0}', space=vmem, size = 0x400, scoped, tag = 'output window, operand 2, single buffered']
    %11 = vsyncpa [#allocation3], 0
    %12 = vsyncpa [#allocation4], 0
    %13 = vsyncpa [#allocation7], 0
    // Predicated region
    $region2: #{tpu_custom_call.1} parent=1 // pred_check
      _
    $region3: #{tpu_custom_call.1} parent=1 // pred_check_branch
      %15 = sbr.rel (0) target = $region5
    $region4: #{tpu_custom_call.1} parent=1 // pred_region
      %s17 = ssub.s32 128, 128
      %18 = vsyncadd [#allocation3], %s17
      %s20 = sshll.u32 [#allocation2], 4
      %s21 = int_to_ptr.vmem [resolvable:$true] %s20
      %23 = dma.hbm_to_vmem [thread:$0]  %s0, 128, %s21, [#allocation3]
    $region5: #{tpu_custom_call.1} parent=1 // pred_fallthru
      _
    // Predicated region
    $region6: #{tpu_custom_call.1} parent=1 // pred_check
      _
    $region7: #{tpu_custom_call.1} parent=1 // pred_check_branch
      %25 = sbr.rel (0) target = $region9
    $region8: #{tpu_custom_call.1} parent=1 // pred_region
      _
    $region9: #{tpu_custom_call.1} parent=1 // pred_fallthru
      _
    // Predicated region
    $region10: #{tpu_custom_call.1} parent=1 // pred_check
      _
    $region11: #{tpu_custom_call.1} parent=1 // pred_check_branch
      %27 = sbr.rel (0) target = $region13
    $region12: #{tpu_custom_call.1} parent=1 // pred_region
      _
    $region13: #{tpu_custom_call.1} parent=1 // pred_fallthru
      _
    // Predicated region
    $region14: #{tpu_custom_call.1} parent=1 // pred_check
      _
    $region15: #{tpu_custom_call.1} parent=1 // pred_check_branch
      %29 = sbr.rel (0) target = $region17
    $region16: #{tpu_custom_call.1} parent=1 // pred_region
      %30 = dma.done [#allocation3], 128
    $region17: #{tpu_custom_call.1} parent=1 // pred_fallthru
      _
    %v31 = vld [vmem:[#allocation2] sm:$0xff]
    %vm32 = vcmask 261120
    %v33 = vsel %vm32, %v31, 0.0
    %v34 = vrot.slane %v33, 4
    %v35 = vadd.f32 %v33, %v34
    %v36 = vrot.slane %v35, 2
    %v37 = vadd.f32 %v35, %v36
    %v38 = vrot.slane %v37, 1
    %v39 = vadd.f32 %v37, %v38
    %v40 = vrcp.pop 8.0
    %v41 = vmul.f32 %v39, %v40
    %v42 = vsub.f32 %v31, %v41
    %v43 = vmul.f32 %v42, %v42
    %v44 = vsel %vm32, %v43, 0.0
    %v45 = vrot.slane %v44, 4
    %v46 = vadd.f32 %v44, %v45
    %v47 = vrot.slane %v46, 2
    %v48 = vadd.f32 %v46, %v47
    %v49 = vrot.slane %v48, 1
    %v50 = vadd.f32 %v48, %v49
    %v51 = vmul.f32 %v50, %v40
    %v52 = vmax.f32 %v51, 1e-10
    %v53 = vrsqrt.pop %v52
    %v54 = vmul.f32 %v52, %v53
    %v55 = vld [vmem:[%s1] sm:$0x1]
    %v56 = vmul.f32 %v53, %v55
    %v57 = vsub.f32 0.0, %v41
    %v58 = vmul.f32 %v57, %v56
    %v59 = vld [vmem:[%s2] sm:$0x1]
    %v60 = vadd.f32 %v58, %v59
    %v61 = vlaneseq
    %v62 = vshrl.u32 %v61, 7
    %v63 = vsub.s32 0, %v62
    %v64 = vrot.slane %v56, %v63
    %v65 = vmul.f32 %v31, %v64
    %v66 = vlaneseq
    %v67 = vshrl.u32 %v66, 7
    %v68 = vsub.s32 0, %v67
    %v69 = vrot.slane %v60, %v68
    %v70 = vadd.f32 %v65, %v69
    %71 = vst.msk [vmem:[#allocation5] sm:$0xff] %vm32, %v70
    %vm72 = vcmask 253952
    %73 = vst.msk [vmem:[#allocation6] sm:$0x1] %vm72, %v41
    %74 = vst.msk [vmem:[#allocation8] sm:$0x1] %vm72, %v54
    // Predicated region
    $region18: #{tpu_custom_call.1} parent=1 // pred_check
      _
    $region19: #{tpu_custom_call.1} parent=1 // pred_check_branch
      %76 = sbr.rel (0) target = $region21
    $region20: #{tpu_custom_call.1} parent=1 // pred_region
      %s78 = ssub.s32 128, 128
      %79 = vsyncadd [#allocation4], %s78
      %s81 = sshll.u32 [#allocation5], 4
      %s82 = int_to_ptr.vmem [resolvable:$true] %s81
      %84 = dma.vmem_to_hbm [thread:$0]  %s82, 128, %s3, [#allocation4]
    $region21: #{tpu_custom_call.1} parent=1 // pred_fallthru
      _
    // Predicated region
    $region22: #{tpu_custom_call.1} parent=1 // pred_check
      _
    $region23: #{tpu_custom_call.1} parent=1 // pred_check_branch
      %86 = sbr.rel (0) target = $region25
    $region24: #{tpu_custom_call.1} parent=1 // pred_region
      %s88 = ssub.s32 16, 16
      %89 = vsyncadd [#allocation7], %s88
      %s91 = sshll.u32 [#allocation6], 4
      %s92 = int_to_ptr.vmem [resolvable:$true] %s91
      %94 = dma.vmem_to_hbm [thread:$0]  %s92, 16, %s4, [#allocation7]
    $region25: #{tpu_custom_call.1} parent=1 // pred_fallthru
      _
    // Predicated region
    $region26: #{tpu_custom_call.1} parent=1 // pred_check
      _
    $region27: #{tpu_custom_call.1} parent=1 // pred_check_branch
      %96 = sbr.rel (0) target = $region29
    $region28: #{tpu_custom_call.1} parent=1 // pred_region
      %s98 = ssub.s32 16, 16
      %99 = vsyncadd [#allocation7], %s98
      %s101 = sshll.u32 [#allocation8], 4
      %s102 = int_to_ptr.vmem [resolvable:$true] %s101
      %104 = dma.vmem_to_hbm [thread:$0]  %s102, 16, %s5, [#allocation7]
    $region29: #{tpu_custom_call.1} parent=1 // pred_fallthru
      _
    // Predicated region
    $region30: #{tpu_custom_call.1} parent=1 // pred_check
      _
    $region31: #{tpu_custom_call.1} parent=1 // pred_check_branch
      %106 = sbr.rel (0) target = $region33
    $region32: #{tpu_custom_call.1} parent=1 // pred_region
      %107 = dma.done [#allocation4], 128
    $region33: #{tpu_custom_call.1} parent=1 // pred_fallthru
      _
    // Predicated region
    $region34: #{tpu_custom_call.1} parent=1 // pred_check
      _
    $region35: #{tpu_custom_call.1} parent=1 // pred_check_branch
      %109 = sbr.rel (0) target = $region37
    $region36: #{tpu_custom_call.1} parent=1 // pred_region
      %110 = dma.done [#allocation7], 16
    $region37: #{tpu_custom_call.1} parent=1 // pred_fallthru
      _
    // Predicated region
    $region38: #{tpu_custom_call.1} parent=1 // pred_check
      _
    $region39: #{tpu_custom_call.1} parent=1 // pred_check_branch
      %112 = sbr.rel (0) target = $region41
    $region40: #{tpu_custom_call.1} parent=1 // pred_region
      %113 = dma.done [#allocation7], 16
    $region41: #{tpu_custom_call.1} parent=1 // pred_fallthru
      _
    %114 = vsyncpa [#allocation3], 1
    %115 = vsyncpa [#allocation4], 1
    %116 = vsyncpa [#allocation7], 1

</llo_original>
